<compile_context>
chip_gen: v7x
topology: tpu7x:2x2x1
jax: 0.10.0
libtpu: 0.0.40
codegen_flags: <defaults>
</compile_context>

<pallas_src>
import jax
import jax.numpy as jnp
from jax.experimental import pallas as pl
from jax.experimental.pallas import tpu as pltpu


def _testq_kernel(obs_ref, act_ref,
                  w0_ref, b0_ref,
                  w1f_ref, w1a_ref, b1_ref,
                  w2_ref, b2_ref,
                  w3t_ref, b3_ref,
                  out_ref):
    # Streamed batch tiles -> bf16 for the MXU; accumulate in f32.
    obs = obs_ref[...].astype(jnp.bfloat16)
    act = act_ref[...].astype(jnp.bfloat16)

    # feature_extractor: Linear(428, 256) + Tanh
    feat = jnp.tanh(
        jnp.dot(obs, w0_ref[...], preferred_element_type=jnp.float32)
        + b0_ref[...]
    )

    # cat(feat, actions) @ W1  ==  feat @ W1[:256] + actions @ W1[256:]
    h1 = jnp.tanh(
        jnp.dot(feat.astype(jnp.bfloat16), w1f_ref[...],
                preferred_element_type=jnp.float32)
        + jnp.dot(act, w1a_ref[...], preferred_element_type=jnp.float32)
        + b1_ref[...]
    )

    # Linear(128, 64) + Tanh
    h2 = jnp.tanh(
        jnp.dot(h1.astype(jnp.bfloat16), w2_ref[...],
                preferred_element_type=jnp.float32)
        + b2_ref[...]
    )

    # Linear(64, 1) + Tanh as a VPU multiply + cross-lane reduce (keeps the MXU
    # free; the output block is tiny so its store cost is negligible).
    q = jnp.sum(h2 * w3t_ref[...], axis=-1, keepdims=True) + b3_ref[...]
    out_ref[...] = jnp.tanh(q).astype(out_ref.dtype)


def testq_forward(obs, actions, params, *, block_b=1024):
    """obs: (B, 4, 107) f32, actions: (B, 6) f32 -> (B, 1) f32."""
    B = obs.shape[0]
    obs_flat = obs.reshape(B, -1)  # (B, 428); contiguous merge, free in XLA
    (w0, b0, w1f, w1a, b1, w2, b2, w3t, b3) = params

    tb = min(block_b, B)
    grid = (pl.cdiv(B, tb),)

    def batch_spec(cols):
        return pl.BlockSpec((tb, cols), lambda i: (i, 0))

    def resident(a):  # full array, same block every step -> VMEM-resident
        return pl.BlockSpec(a.shape, lambda i: (0,) * a.ndim)

    in_specs = [
        batch_spec(obs_flat.shape[1]),     # obs tile (streamed / pipelined)
        batch_spec(actions.shape[1]),      # actions tile (streamed / pipelined)
        resident(w0), resident(b0),
        resident(w1f), resident(w1a), resident(b1),
        resident(w2), resident(b2),
        resident(w3t), resident(b3),
    ]
    out_spec = pl.BlockSpec((tb, 1), lambda i: (i, 0))

    weight_bytes = sum(int(w.size) * w.dtype.itemsize for w in (w0, w1f, w1a, w2))
    bias_bytes = sum(int(a.size) * a.dtype.itemsize for a in (b0, b1, b2, w3t, b3))
    cost = pl.CostEstimate(
        flops=2 * B * (428 * 256 + 262 * 128 + 128 * 64 + 64),
        transcendentals=B * (256 + 128 + 64 + 1),
        bytes_accessed=int(obs_flat.size) * 4 + int(actions.size) * 4
                       + B * 4 + weight_bytes + bias_bytes,
    )

    return pl.pallas_call(
        _testq_kernel,
        out_shape=jax.ShapeDtypeStruct((B, 1), jnp.float32),
        grid=grid,
        in_specs=in_specs,
        out_specs=out_spec,
        compiler_params=pltpu.CompilerParams(
            dimension_semantics=("parallel",)),
        cost_estimate=cost,
    )(obs_flat, actions, w0, b0, w1f, w1a, b1, w2, b2, w3t, b3)


def init_params(key):
    ks = jax.random.split(key, 8)

    def lin(kw, kb, din, dout):
        scale = 1.0 / jnp.sqrt(jnp.float32(din))
        w = jax.random.uniform(kw, (din, dout), jnp.float32, -scale, scale)
        b = jax.random.uniform(kb, (1, dout), jnp.float32, -scale, scale)
        return w, b

    w0, b0 = lin(ks[0], ks[1], 4 * 107, 256)     # feature_extractor Linear
    w1, b1 = lin(ks[2], ks[3], 256 + 6, 128)     # mlp Linear 0
    w2, b2 = lin(ks[4], ks[5], 128, 64)          # mlp Linear 2
    w3, b3 = lin(ks[6], ks[7], 64, 1)            # mlp Linear 4
    w1f, w1a = w1[:256, :], w1[256:, :]          # split the concat input

    bf16 = jnp.bfloat16
    return (w0.astype(bf16), b0,
            w1f.astype(bf16), w1a.astype(bf16), b1,
            w2.astype(bf16), b2,
            w3.reshape(1, 64).astype(jnp.float32),   # transposed row for VPU final layer
            b3.reshape(1, 1).astype(jnp.float32))    # (1,1) bias, broadcast in-kernel


def reference_forward(obs, actions, params):
    """Pure-JAX reference with the same bf16-matmul / f32-accumulation math."""
    (w0, b0, w1f, w1a, b1, w2, b2, w3t, b3) = params
    bf16, f32 = jnp.bfloat16, jnp.float32
    x = obs.reshape(obs.shape[0], -1)
    feat = jnp.tanh(jnp.dot(x.astype(bf16), w0, preferred_element_type=f32) + b0)
    h1 = jnp.tanh(jnp.dot(feat.astype(bf16), w1f, preferred_element_type=f32)
                  + jnp.dot(actions.astype(bf16), w1a, preferred_element_type=f32)
                  + b1)
    h2 = jnp.tanh(jnp.dot(h1.astype(bf16), w2, preferred_element_type=f32) + b2)
    return jnp.tanh(jnp.sum(h2 * w3t, axis=-1, keepdims=True) + b3)


if __name__ == "__main__":
    key = jax.random.PRNGKey(0)
    k_obs, k_act, k_param = jax.random.split(key, 3)
    params = init_params(k_param)

    # Small-shape check (single grid step; blocks == full arrays).
    B = 2
    obs = jax.random.normal(k_obs, (B, 4, 107), jnp.float32)
    actions = jax.random.normal(k_act, (B, 6), jnp.float32)
    out = jax.block_until_ready(testq_forward(obs, actions, params))
    ref = reference_forward(obs, actions, params)
    assert out.shape == (B, 1)
    assert jnp.allclose(out, ref, atol=2e-3, rtol=2e-3), "mismatch vs reference (B=2)"

    # Multi-tile check (exercises the pipelined batch grid).
    B2 = 256
    obs2 = jax.random.normal(k_obs, (B2, 4, 107), jnp.float32)
    actions2 = jax.random.normal(k_act, (B2, 6), jnp.float32)
    out2 = jax.block_until_ready(
        testq_forward(obs2, actions2, params, block_b=128))
    ref2 = reference_forward(obs2, actions2, params)
    assert out2.shape == (B2, 1)
    assert jnp.allclose(out2, ref2, atol=2e-3, rtol=2e-3), "mismatch vs reference (B=256)"

    print("KERNEL_OK")
</pallas_src>

<mosaic_0001>
module attributes {stable_mosaic.version = 11 : i64} {
  func.func @_testq_kernel(%arg0: i32, %arg1: memref<2x428xf32, #tpu.memory_space<vmem>>, %arg2: memref<2x6xf32, #tpu.memory_space<vmem>>, %arg3: memref<428x256xbf16, #tpu.memory_space<vmem>>, %arg4: memref<1x256xf32, #tpu.memory_space<vmem>>, %arg5: memref<256x128xbf16, #tpu.memory_space<vmem>>, %arg6: memref<6x128xbf16, #tpu.memory_space<vmem>>, %arg7: memref<1x128xf32, #tpu.memory_space<vmem>>, %arg8: memref<128x64xbf16, #tpu.memory_space<vmem>>, %arg9: memref<1x64xf32, #tpu.memory_space<vmem>>, %arg10: memref<1x64xf32, #tpu.memory_space<vmem>>, %arg11: memref<1x1xf32, #tpu.memory_space<vmem>>, %arg12: memref<2x1xf32, #tpu.memory_space<vmem>>) attributes {dimension_semantics = [#tpu.dimension_semantics<parallel>], iteration_bounds = array<i64: 1>, scalar_prefetch = 0 : i64, scratch_operands = 0 : i64, tpu.core_type = #tpu.core_type<tc>, window_params = [{transform_indices = @transform_0, window_bounds = array<i64: 2, 428>}, {transform_indices = @transform_1, window_bounds = array<i64: 2, 6>}, {pipeline_mode = #tpu.pipeline_mode<synchronous>, transform_indices = @transform_2, window_bounds = array<i64: 428, 256>}, {pipeline_mode = #tpu.pipeline_mode<synchronous>, transform_indices = @transform_3, window_bounds = array<i64: 1, 256>}, {pipeline_mode = #tpu.pipeline_mode<synchronous>, transform_indices = @transform_4, window_bounds = array<i64: 256, 128>}, {pipeline_mode = #tpu.pipeline_mode<synchronous>, transform_indices = @transform_5, window_bounds = array<i64: 6, 128>}, {pipeline_mode = #tpu.pipeline_mode<synchronous>, transform_indices = @transform_6, window_bounds = array<i64: 1, 128>}, {pipeline_mode = #tpu.pipeline_mode<synchronous>, transform_indices = @transform_7, window_bounds = array<i64: 128, 64>}, {pipeline_mode = #tpu.pipeline_mode<synchronous>, transform_indices = @transform_8, window_bounds = array<i64: 1, 64>}, {pipeline_mode = #tpu.pipeline_mode<synchronous>, transform_indices = @transform_9, window_bounds = array<i64: 1, 64>}, {pipeline_mode = #tpu.pipeline_mode<synchronous>, transform_indices = @transform_10, window_bounds = array<i64: 1, 1>}, {transform_indices = @transform_11, window_bounds = array<i64: 2, 1>}]} {
    %c0 = arith.constant 0 : index
    %c0_0 = arith.constant 0 : index
    %0 = vector.load %arg1[%c0, %c0_0] : memref<2x428xf32, #tpu.memory_space<vmem>>, vector<2x428xf32>
    %1 = arith.truncf %0 : vector<2x428xf32> to vector<2x428xbf16>
    %c0_1 = arith.constant 0 : index
    %c0_2 = arith.constant 0 : index
    %2 = vector.load %arg2[%c0_1, %c0_2] : memref<2x6xf32, #tpu.memory_space<vmem>>, vector<2x6xf32>
    %3 = arith.truncf %2 : vector<2x6xf32> to vector<2x6xbf16>
    %c0_3 = arith.constant 0 : index
    %c0_4 = arith.constant 0 : index
    %4 = vector.load %arg3[%c0_3, %c0_4] : memref<428x256xbf16, #tpu.memory_space<vmem>>, vector<428x256xbf16>
    %cst = arith.constant dense<0.000000e+00> : vector<2x256xf32>
    %5 = tpu.matmul %1, %4, %cst {dimension_numbers = #tpu.dot_dimension_numbers<[1], [0], [0], [1], [0, 0, 1, 1], [], []>} : vector<2x428xbf16>, vector<428x256xbf16>, vector<2x256xf32> -> vector<2x256xf32>
    %c0_5 = arith.constant 0 : index
    %c0_6 = arith.constant 0 : index
    %6 = vector.load %arg4[%c0_5, %c0_6] : memref<1x256xf32, #tpu.memory_space<vmem>>, vector<1x256xf32>
    %7 = vector.broadcast %6 : vector<1x256xf32> to vector<2x256xf32>
    %8 = arith.addf %5, %7 : vector<2x256xf32>
    %9 = math.tanh %8 : vector<2x256xf32>
    %10 = arith.truncf %9 : vector<2x256xf32> to vector<2x256xbf16>
    %c0_7 = arith.constant 0 : index
    %c0_8 = arith.constant 0 : index
    %11 = vector.load %arg5[%c0_7, %c0_8] : memref<256x128xbf16, #tpu.memory_space<vmem>>, vector<256x128xbf16>
    %cst_9 = arith.constant dense<0.000000e+00> : vector<2x128xf32>
    %12 = tpu.matmul %10, %11, %cst_9 {dimension_numbers = #tpu.dot_dimension_numbers<[1], [0], [0], [1], [0, 0, 1, 1], [], []>} : vector<2x256xbf16>, vector<256x128xbf16>, vector<2x128xf32> -> vector<2x128xf32>
    %c0_10 = arith.constant 0 : index
    %c0_11 = arith.constant 0 : index
    %13 = vector.load %arg6[%c0_10, %c0_11] : memref<6x128xbf16, #tpu.memory_space<vmem>>, vector<6x128xbf16>
    %cst_12 = arith.constant dense<0.000000e+00> : vector<2x128xf32>
    %14 = tpu.matmul %3, %13, %cst_12 {dimension_numbers = #tpu.dot_dimension_numbers<[1], [0], [0], [1], [0, 0, 1, 1], [], []>} : vector<2x6xbf16>, vector<6x128xbf16>, vector<2x128xf32> -> vector<2x128xf32>
    %15 = arith.addf %12, %14 : vector<2x128xf32>
    %c0_13 = arith.constant 0 : index
    %c0_14 = arith.constant 0 : index
    %16 = vector.load %arg7[%c0_13, %c0_14] : memref<1x128xf32, #tpu.memory_space<vmem>>, vector<1x128xf32>
    %17 = vector.broadcast %16 : vector<1x128xf32> to vector<2x128xf32>
    %18 = arith.addf %15, %17 : vector<2x128xf32>
    %19 = math.tanh %18 : vector<2x128xf32>
    %20 = arith.truncf %19 : vector<2x128xf32> to vector<2x128xbf16>
    %c0_15 = arith.constant 0 : index
    %c0_16 = arith.constant 0 : index
    %21 = vector.load %arg8[%c0_15, %c0_16] : memref<128x64xbf16, #tpu.memory_space<vmem>>, vector<128x64xbf16>
    %cst_17 = arith.constant dense<0.000000e+00> : vector<2x64xf32>
    %22 = tpu.matmul %20, %21, %cst_17 {dimension_numbers = #tpu.dot_dimension_numbers<[1], [0], [0], [1], [0, 0, 1, 1], [], []>} : vector<2x128xbf16>, vector<128x64xbf16>, vector<2x64xf32> -> vector<2x64xf32>
    %c0_18 = arith.constant 0 : index
    %c0_19 = arith.constant 0 : index
    %23 = vector.load %arg9[%c0_18, %c0_19] : memref<1x64xf32, #tpu.memory_space<vmem>>, vector<1x64xf32>
    %24 = vector.broadcast %23 : vector<1x64xf32> to vector<2x64xf32>
    %25 = arith.addf %22, %24 : vector<2x64xf32>
    %26 = math.tanh %25 : vector<2x64xf32>
    %c0_20 = arith.constant 0 : index
    %c0_21 = arith.constant 0 : index
    %27 = vector.load %arg10[%c0_20, %c0_21] : memref<1x64xf32, #tpu.memory_space<vmem>>, vector<1x64xf32>
    %28 = vector.broadcast %27 : vector<1x64xf32> to vector<2x64xf32>
    %29 = arith.mulf %26, %28 : vector<2x64xf32>
    %cst_22 = arith.constant dense<0.000000e+00> : vector<2xf32>
    %30 = vector.multi_reduction <add>, %29, %cst_22 [1] : vector<2x64xf32> to vector<2xf32>
    %31 = vector.shape_cast %30 : vector<2xf32> to vector<2x1xf32>
    %c0_23 = arith.constant 0 : index
    %c0_24 = arith.constant 0 : index
    %32 = vector.load %arg11[%c0_23, %c0_24] : memref<1x1xf32, #tpu.memory_space<vmem>>, vector<1x1xf32>
    %33 = vector.broadcast %32 : vector<1x1xf32> to vector<2x1xf32>
    %34 = arith.addf %31, %33 : vector<2x1xf32>
    %35 = math.tanh %34 : vector<2x1xf32>
    %c0_25 = arith.constant 0 : index
    %c0_26 = arith.constant 0 : index
    %36 = vector.load %arg12[%c0_25, %c0_26] : memref<2x1xf32, #tpu.memory_space<vmem>>, vector<2x1xf32>
    tpu.vector_store %arg12[%c0_25, %c0_26], %35 {strides = array<i32>} : memref<2x1xf32, #tpu.memory_space<vmem>>, vector<2x1xf32>,
    return
  }
  func.func @transform_0(%arg0: i32) -> (i32, i32) {
    %c0_i32 = arith.constant 0 : i32
    %c0_i32_0 = arith.constant 0 : i32
    return %arg0, %c0_i32 : i32, i32
  }
  func.func @transform_1(%arg0: i32) -> (i32, i32) {
    %c0_i32 = arith.constant 0 : i32
    %c0_i32_0 = arith.constant 0 : i32
    return %arg0, %c0_i32 : i32, i32
  }
  func.func @transform_2(%arg0: i32) -> (i32, i32) {
    %c0_i32 = arith.constant 0 : i32
    %c0_i32_0 = arith.constant 0 : i32
    %c0_i32_1 = arith.constant 0 : i32
    return %c0_i32, %c0_i32_0 : i32, i32
  }
  func.func @transform_3(%arg0: i32) -> (i32, i32) {
    %c0_i32 = arith.constant 0 : i32
    %c0_i32_0 = arith.constant 0 : i32
    %c0_i32_1 = arith.constant 0 : i32
    return %c0_i32, %c0_i32_0 : i32, i32
  }
  func.func @transform_4(%arg0: i32) -> (i32, i32) {
    %c0_i32 = arith.constant 0 : i32
    %c0_i32_0 = arith.constant 0 : i32
    %c0_i32_1 = arith.constant 0 : i32
    return %c0_i32, %c0_i32_0 : i32, i32
  }
  func.func @transform_5(%arg0: i32) -> (i32, i32) {
    %c0_i32 = arith.constant 0 : i32
    %c0_i32_0 = arith.constant 0 : i32
    %c0_i32_1 = arith.constant 0 : i32
    return %c0_i32, %c0_i32_0 : i32, i32
  }
  func.func @transform_6(%arg0: i32) -> (i32, i32) {
    %c0_i32 = arith.constant 0 : i32
    %c0_i32_0 = arith.constant 0 : i32
    %c0_i32_1 = arith.constant 0 : i32
    return %c0_i32, %c0_i32_0 : i32, i32
  }
  func.func @transform_7(%arg0: i32) -> (i32, i32) {
    %c0_i32 = arith.constant 0 : i32
    %c0_i32_0 = arith.constant 0 : i32
    %c0_i32_1 = arith.constant 0 : i32
    return %c0_i32, %c0_i32_0 : i32, i32
  }
  func.func @transform_8(%arg0: i32) -> (i32, i32) {
    %c0_i32 = arith.constant 0 : i32
    %c0_i32_0 = arith.constant 0 : i32
    %c0_i32_1 = arith.constant 0 : i32
    return %c0_i32, %c0_i32_0 : i32, i32
  }
  func.func @transform_9(%arg0: i32) -> (i32, i32) {
    %c0_i32 = arith.constant 0 : i32
    %c0_i32_0 = arith.constant 0 : i32
    %c0_i32_1 = arith.constant 0 : i32
    return %c0_i32, %c0_i32_0 : i32, i32
  }
  func.func @transform_10(%arg0: i32) -> (i32, i32) {
    %c0_i32 = arith.constant 0 : i32
    %c0_i32_0 = arith.constant 0 : i32
    %c0_i32_1 = arith.constant 0 : i32
    return %c0_i32, %c0_i32_0 : i32, i32
  }
  func.func @transform_11(%arg0: i32) -> (i32, i32) {
    %c0_i32 = arith.constant 0 : i32
    %c0_i32_0 = arith.constant 0 : i32
    return %arg0, %c0_i32 : i32, i32
  }
}

</mosaic_0001>

<llo_original>
// kernel: tpu_custom_call.1
$region0: #{tpu_custom_call.1}
  #allocation0 [shape = 'u32[]', space=smem, size = 0x4, offset = 0x4, fixed_abs, tag = 'smem constant byte address 0x4 - core index']
  #allocation1 [shape = 'u32[144,128]{1,0:T(1,128)}', space=vmem, size = 0x12000, scoped, tag = 'internal scratch']
  #allocation2 [shape = 'f32[1,1]{1,0:T(1,128)S(1)}', space=vmem, size = 0x200, scoped, tag = 'scoped memory for tpu_custom_call.1']
  %s0 = inlined_call_operand.vmem [shape: f32[2,428], index: 0, kind: input, shape index: {}]
  %s1 = inlined_call_operand.vmem [shape: f32[2,6], index: 1, kind: input, shape index: {}]
  %s2 = inlined_call_operand.hbm [shape: bf16[428,256], index: 2, kind: input, shape index: {}]
  %s3 = inlined_call_operand.vmem [shape: f32[1,256], index: 3, kind: input, shape index: {}]
  %s4 = inlined_call_operand.hbm [shape: bf16[256,128], index: 4, kind: input, shape index: {}]
  %s5 = inlined_call_operand.vmem [shape: bf16[6,128], index: 5, kind: input, shape index: {}]
  %s6 = inlined_call_operand.vmem [shape: f32[1,128], index: 6, kind: input, shape index: {}]
  %s7 = inlined_call_operand.vmem [shape: bf16[128,64], index: 7, kind: input, shape index: {}]
  %s8 = inlined_call_operand.vmem [shape: f32[1,64], index: 8, kind: input, shape index: {}]
  %s9 = inlined_call_operand.vmem [shape: f32[1,64], index: 9, kind: input, shape index: {}]
  %s10 = inlined_call_operand.<no memory space> [shape: f32[1,1], index: 10, kind: input, shape index: {}]
  %s11 = inlined_call_operand.vmem [shape: f32[2,1], index: 11, kind: output, shape index: {}]
  %s12 = sld [smem:[#allocation0]]
  $region62: #{tpu_custom_call.1} parent=0
    _
  %s14 = ssub.s32 1, %s12
  %s15 = scalar_select 0, %s14, %s12
  %v16 = vstv %s10
  %17 = vst [vmem:[#allocation2] sm:$0x1] %v16
  $region1: #{tpu_custom_call.1} parent=0
    #allocation3 [shape = 'u8[221184]{0}', space=vmem, size = 0x36000, scoped, tag = 'input window, operand 2, single buffered']
    #allocation4 [shape = 's32[1]{0}', space=sflag, size = 0x4, scoped, tag = 'scoped memory for tpu_custom_call.1']
    #allocation5 [shape = 'u8[65536]{0}', space=vmem, size = 0x10000, scoped, tag = 'input window, operand 4, single buffered']
    #allocation6 [shape = 's32[1]{0}', space=sflag, size = 0x4, scoped, tag = 'scoped memory for tpu_custom_call.1']
    %18 = vsyncpa [#allocation4], 0
    %19 = vsyncpa [#allocation6], 0
    // Predicated region
    $region2: #{tpu_custom_call.1} parent=1 // pred_check
      _
    $region3: #{tpu_custom_call.1} parent=1 // pred_check_branch
      %21 = sbr.rel (0) target = $region5
    $region4: #{tpu_custom_call.1} parent=1 // pred_region
      _
    $region5: #{tpu_custom_call.1} parent=1 // pred_fallthru
      _
    // Predicated region
    $region6: #{tpu_custom_call.1} parent=1 // pred_check
      _
    $region7: #{tpu_custom_call.1} parent=1 // pred_check_branch
      %23 = sbr.rel (0) target = $region9
    $region8: #{tpu_custom_call.1} parent=1 // pred_region
      _
    $region9: #{tpu_custom_call.1} parent=1 // pred_fallthru
      _
    // Predicated region
    $region10: #{tpu_custom_call.1} parent=1 // pred_check
      _
    $region11: #{tpu_custom_call.1} parent=1 // pred_check_branch
      %25 = sbr.rel (0) target = $region13
    $region12: #{tpu_custom_call.1} parent=1 // pred_region
      %s27 = ssub.s32 6912, 6912
      %28 = vsyncadd [#allocation4], %s27
      %s29 = sshll.u32 [#allocation3], 4
      %s30 = int_to_ptr.vmem [resolvable:$true] %s29
      %35 = dma.hbm_to_vmem [thread:$0]  %s2, 6912, %s30, [#allocation4], 128, 128, 8
    $region13: #{tpu_custom_call.1} parent=1 // pred_fallthru
      _
    // Predicated region
    $region14: #{tpu_custom_call.1} parent=1 // pred_check
      _
    $region15: #{tpu_custom_call.1} parent=1 // pred_check_branch
      %37 = sbr.rel (0) target = $region17
    $region16: #{tpu_custom_call.1} parent=1 // pred_region
      _
    $region17: #{tpu_custom_call.1} parent=1 // pred_fallthru
      _
    // Predicated region
    $region18: #{tpu_custom_call.1} parent=1 // pred_check
      _
    $region19: #{tpu_custom_call.1} parent=1 // pred_check_branch
      %39 = sbr.rel (0) target = $region21
    $region20: #{tpu_custom_call.1} parent=1 // pred_region
      %s41 = ssub.s32 2048, 2048
      %42 = vsyncadd [#allocation6], %s41
      %s43 = sshll.u32 [#allocation5], 4
      %s44 = int_to_ptr.vmem [resolvable:$true] %s43
      %49 = dma.hbm_to_vmem [thread:$0]  %s4, 2048, %s44, [#allocation6], 64, 64, 4
    $region21: #{tpu_custom_call.1} parent=1 // pred_fallthru
      _
    // Predicated region
    $region22: #{tpu_custom_call.1} parent=1 // pred_check
      _
    $region23: #{tpu_custom_call.1} parent=1 // pred_check_branch
      %51 = sbr.rel (0) target = $region25
    $region24: #{tpu_custom_call.1} parent=1 // pred_region
      _
    $region25: #{tpu_custom_call.1} parent=1 // pred_fallthru
      _
    // Predicated region
    $region26: #{tpu_custom_call.1} parent=1 // pred_check
      _
    $region27: #{tpu_custom_call.1} parent=1 // pred_check_branch
      %53 = sbr.rel (0) target = $region29
    $region28: #{tpu_custom_call.1} parent=1 // pred_region
      _
    $region29: #{tpu_custom_call.1} parent=1 // pred_fallthru
      _
    // Predicated region
    $region30: #{tpu_custom_call.1} parent=1 // pred_check
      _
    $region31: #{tpu_custom_call.1} parent=1 // pred_check_branch
      %55 = sbr.rel (0) target = $region33
    $region32: #{tpu_custom_call.1} parent=1 // pred_region
      _
    $region33: #{tpu_custom_call.1} parent=1 // pred_fallthru
      _
    // Predicated region
    $region34: #{tpu_custom_call.1} parent=1 // pred_check
      _
    $region35: #{tpu_custom_call.1} parent=1 // pred_check_branch
      %57 = sbr.rel (0) target = $region37
    $region36: #{tpu_custom_call.1} parent=1 // pred_region
      _
    $region37: #{tpu_custom_call.1} parent=1 // pred_fallthru
      _
    // Predicated region
    $region38: #{tpu_custom_call.1} parent=1 // pred_check
      _
    $region39: #{tpu_custom_call.1} parent=1 // pred_check_branch
      %59 = sbr.rel (0) target = $region41
    $region40: #{tpu_custom_call.1} parent=1 // pred_region
      _
    $region41: #{tpu_custom_call.1} parent=1 // pred_fallthru
      _
    // Predicated region
    $region42: #{tpu_custom_call.1} parent=1 // pred_check
      _
    $region43: #{tpu_custom_call.1} parent=1 // pred_check_branch
      %61 = sbr.rel (0) target = $region45
    $region44: #{tpu_custom_call.1} parent=1 // pred_region
      _
    $region45: #{tpu_custom_call.1} parent=1 // pred_fallthru
      _
    // Predicated region
    $region46: #{tpu_custom_call.1} parent=1 // pred_check
      _
    $region47: #{tpu_custom_call.1} parent=1 // pred_check_branch
      %63 = sbr.rel (0) target = $region49
    $region48: #{tpu_custom_call.1} parent=1 // pred_region
      %64 = dma.done [#allocation4], 6912
    $region49: #{tpu_custom_call.1} parent=1 // pred_fallthru
      _
    // Predicated region
    $region50: #{tpu_custom_call.1} parent=1 // pred_check
      _
    $region51: #{tpu_custom_call.1} parent=1 // pred_check_branch
      %66 = sbr.rel (0) target = $region53
    $region52: #{tpu_custom_call.1} parent=1 // pred_region
      %67 = dma.done [#allocation6], 2048
    $region53: #{tpu_custom_call.1} parent=1 // pred_fallthru
      _
    %v69 = vld [vmem:[%s0] sm:$0xff]
    %v71 = vcombine.high %v69, %v69
    %v73 = vunpack.c.l.s4 1983009808
    %v74 = vunpack.c.0.s8 %v73
    %v75 = vlaneseq
    %v76 = vshrl.u32 %v75, 7
    %v77 = vsub.s32 %v74, %v76
    %v78 = vrot.slane %v69, %v77
    %v80 = vunpack.c.l.s4 1983009808
    %v81 = vunpack.c.0.s8 %v80
    %v82 = vlaneseq
    %v83 = vshrl.u32 %v82, 7
    %v84 = vsub.s32 %v81, %v83
    %v85 = vrot.slane %v71, %v84
    %v86 = vcombine.high %v78, %v78
    %v87 = vcombine.high %v85, %v85
    %v92 = vpack.c.bf16 %v78, %v78
    %v93 = vpack.c.bf16 %v86, %v86
    %v94 = vpack.c.bf16 %v85, %v85
    %v95 = vpack.c.bf16 %v87, %v87
    %v96 = vld [vmem:[%s1] sm:$0x3]
    %v97 = vpack.c.bf16 %v96, %v96
    %v98 = vld [vmem:[#allocation3] sm:$0xff]
    %v99 = vld [vmem:[#allocation3 + $0x8] sm:$0xff]
    %v100 = vld [vmem:[#allocation3 + $0x10] sm:$0xff]
    %v101 = vld [vmem:[#allocation3 + $0x18] sm:$0xff]
    %v102 = vld [vmem:[#allocation3 + $0x20] sm:$0xff]
    %v103 = vld [vmem:[#allocation3 + $0x28] sm:$0xff]
    %v104 = vld [vmem:[#allocation3 + $0x30] sm:$0xff]
    %v105 = vld [vmem:[#allocation3 + $0x38] sm:$0xff]
    %v106 = vld [vmem:[#allocation3 + $0x40] sm:$0xff]
    %v107 = vld [vmem:[#allocation3 + $0x48] sm:$0xff]
    %v108 = vld [vmem:[#allocation3 + $0x50] sm:$0xff]
    %v109 = vld [vmem:[#allocation3 + $0x58] sm:$0xff]
    %v110 = vld [vmem:[#allocation3 + $0x60] sm:$0xff]
    %v111 = vld [vmem:[#allocation3 + $0x68] sm:$0xff]
    %v112 = vld [vmem:[#allocation3 + $0x70] sm:$0xff]
    %v113 = vld [vmem:[#allocation3 + $0x78] sm:$0xff]
    %v114 = vld [vmem:[#allocation3 + $0x80] sm:$0xff]
    %v115 = vld [vmem:[#allocation3 + $0x88] sm:$0xff]
    %v116 = vld [vmem:[#allocation3 + $0x90] sm:$0xff]
    %v117 = vld [vmem:[#allocation3 + $0x98] sm:$0xff]
    %v118 = vld [vmem:[#allocation3 + $0xa0] sm:$0xff]
    %v119 = vld [vmem:[#allocation3 + $0xa8] sm:$0xff]
    %v120 = vld [vmem:[#allocation3 + $0xb0] sm:$0xff]
    %v121 = vld [vmem:[#allocation3 + $0xb8] sm:$0xff]
    %v122 = vld [vmem:[#allocation3 + $0xc0] sm:$0xff]
    %v123 = vld [vmem:[#allocation3 + $0xc8] sm:$0xff]
    %v124 = vld [vmem:[#allocation3 + $0xd0] sm:$0xff]
    %v125 = vld [vmem:[#allocation3 + $0xd8] sm:$0xff]
    %v126 = vld [vmem:[#allocation3 + $0xe0] sm:$0xff]
    %v127 = vld [vmem:[#allocation3 + $0xe8] sm:$0xff]
    %v128 = vld [vmem:[#allocation3 + $0xf0] sm:$0xff]
    %v129 = vld [vmem:[#allocation3 + $0xf8] sm:$0xff]
    %v130 = vld [vmem:[#allocation3 + $0x100] sm:$0xff]
    %v131 = vld [vmem:[#allocation3 + $0x108] sm:$0xff]
    %v132 = vld [vmem:[#allocation3 + $0x110] sm:$0xff]
    %v133 = vld [vmem:[#allocation3 + $0x118] sm:$0xff]
    %v134 = vld [vmem:[#allocation3 + $0x120] sm:$0xff]
    %v135 = vld [vmem:[#allocation3 + $0x128] sm:$0xff]
    %v136 = vld [vmem:[#allocation3 + $0x130] sm:$0xff]
    %v137 = vld [vmem:[#allocation3 + $0x138] sm:$0xff]
    %v138 = vld [vmem:[#allocation3 + $0x140] sm:$0xff]
    %v139 = vld [vmem:[#allocation3 + $0x148] sm:$0xff]
    %v140 = vld [vmem:[#allocation3 + $0x150] sm:$0xff]
    %v141 = vld [vmem:[#allocation3 + $0x158] sm:$0xff]
    %v142 = vld [vmem:[#allocation3 + $0x160] sm:$0xff]
    %v143 = vld [vmem:[#allocation3 + $0x168] sm:$0xff]
    %v144 = vld [vmem:[#allocation3 + $0x170] sm:$0xff]
    %v145 = vld [vmem:[#allocation3 + $0x178] sm:$0xff]
    %v146 = vld [vmem:[#allocation3 + $0x180] sm:$0xff]
    %v147 = vld [vmem:[#allocation3 + $0x188] sm:$0xff]
    %v148 = vld [vmem:[#allocation3 + $0x190] sm:$0xff]
    %v149 = vld [vmem:[#allocation3 + $0x198] sm:$0xff]
    %v150 = vld [vmem:[#allocation3 + $0x1a0] sm:$0xff]
    %v151 = vld [vmem:[#allocation3 + $0x1a8] sm:$0x33]
    %v152 = vld [vmem:[%s3] sm:$0x3]
    %v154 = vlaneseq
    %v155 = vshrl.u32 %v154, 7
    %v156 = vsub.s32 0, %v155
    %v157 = vrot.slane %v152, %v156
    %v158 = vlaneseq
    %v159 = vshrl.u32 %v158, 7
    %v160 = vsub.s32 1, %v159
    %v161 = vrot.slane %v152, %v160
    %v218 = vunpack.c.l.b16 %v98
    %v219 = vunpack.c.h.b16 %v98
    %v220 = vunpack.c.l.b16 %v99
    %v221 = vunpack.c.h.b16 %v99
    %v222 = vunpack.c.l.b16 %v100
    %v223 = vunpack.c.h.b16 %v100
    %v224 = vunpack.c.l.b16 %v101
    %v225 = vunpack.c.h.b16 %v101
    %v226 = vunpack.c.l.b16 %v102
    %v227 = vunpack.c.h.b16 %v102
    %v228 = vunpack.c.l.b16 %v103
    %v229 = vunpack.c.h.b16 %v103
    %v230 = vunpack.c.l.b16 %v104
    %v231 = vunpack.c.h.b16 %v104
    %v232 = vunpack.c.l.b16 %v105
    %v233 = vunpack.c.h.b16 %v105
    %v234 = vunpack.c.l.b16 %v106
    %v235 = vunpack.c.h.b16 %v106
    %v236 = vunpack.c.l.b16 %v107
    %v237 = vunpack.c.h.b16 %v107
    %v238 = vunpack.c.l.b16 %v108
    %v239 = vunpack.c.h.b16 %v108
    %v240 = vunpack.c.l.b16 %v109
    %v241 = vunpack.c.h.b16 %v109
    %v242 = vunpack.c.l.b16 %v110
    %v243 = vunpack.c.h.b16 %v110
    %v244 = vunpack.c.l.b16 %v111
    %v245 = vunpack.c.h.b16 %v111
    %v246 = vunpack.c.l.b16 %v112
    %v247 = vunpack.c.h.b16 %v112
    %v248 = vunpack.c.l.b16 %v113
    %v249 = vunpack.c.h.b16 %v113
    %v250 = vunpack.c.l.b16 %v114
    %v251 = vunpack.c.h.b16 %v114
    %v252 = vunpack.c.l.b16 %v115
    %v253 = vunpack.c.h.b16 %v115
    %v254 = vunpack.c.l.b16 %v116
    %v255 = vunpack.c.h.b16 %v116
    %v256 = vunpack.c.l.b16 %v117
    %v257 = vunpack.c.h.b16 %v117
    %v258 = vunpack.c.l.b16 %v118
    %v259 = vunpack.c.h.b16 %v118
    %v260 = vunpack.c.l.b16 %v119
    %v261 = vunpack.c.h.b16 %v119
    %v262 = vunpack.c.l.b16 %v120
    %v263 = vunpack.c.h.b16 %v120
    %v264 = vunpack.c.l.b16 %v121
    %v265 = vunpack.c.h.b16 %v121
    %v266 = vunpack.c.l.b16 %v122
    %v267 = vunpack.c.h.b16 %v122
    %v268 = vunpack.c.l.b16 %v123
    %v269 = vunpack.c.h.b16 %v123
    %v270 = vunpack.c.l.b16 %v124
    %v271 = vunpack.c.h.b16 %v124
    %v272 = vunpack.c.l.b16 %v125
    %v273 = vunpack.c.h.b16 %v125
    %v274 = vunpack.c.l.b16 %v126
    %v275 = vunpack.c.h.b16 %v126
    %v276 = vunpack.c.l.b16 %v127
    %v277 = vunpack.c.h.b16 %v127
    %v278 = vunpack.c.l.b16 %v128
    %v279 = vunpack.c.h.b16 %v128
    %v280 = vunpack.c.l.b16 %v129
    %v281 = vunpack.c.h.b16 %v129
    %v282 = vunpack.c.l.b16 %v130
    %v283 = vunpack.c.h.b16 %v130
    %v284 = vunpack.c.l.b16 %v131
    %v285 = vunpack.c.h.b16 %v131
    %v286 = vunpack.c.l.b16 %v132
    %v287 = vunpack.c.h.b16 %v132
    %v288 = vunpack.c.l.b16 %v133
    %v289 = vunpack.c.h.b16 %v133
    %v290 = vunpack.c.l.b16 %v134
    %v291 = vunpack.c.h.b16 %v134
    %v292 = vunpack.c.l.b16 %v135
    %v293 = vunpack.c.h.b16 %v135
    %v294 = vunpack.c.l.b16 %v136
    %v295 = vunpack.c.h.b16 %v136
    %v296 = vunpack.c.l.b16 %v137
    %v297 = vunpack.c.h.b16 %v137
    %v298 = vunpack.c.l.b16 %v138
    %v299 = vunpack.c.h.b16 %v138
    %v300 = vunpack.c.l.b16 %v139
    %v301 = vunpack.c.h.b16 %v139
    %v302 = vunpack.c.l.b16 %v140
    %v303 = vunpack.c.h.b16 %v140
    %v304 = vunpack.c.l.b16 %v141
    %v305 = vunpack.c.h.b16 %v141
    %v306 = vunpack.c.l.b16 %v142
    %v307 = vunpack.c.h.b16 %v142
    %v308 = vunpack.c.l.b16 %v143
    %v309 = vunpack.c.h.b16 %v143
    %v310 = vunpack.c.l.b16 %v144
    %v311 = vunpack.c.h.b16 %v144
    %v312 = vunpack.c.l.b16 %v145
    %v313 = vunpack.c.h.b16 %v145
    %v314 = vunpack.c.l.b16 %v146
    %v315 = vunpack.c.h.b16 %v146
    %v316 = vunpack.c.l.b16 %v147
    %v317 = vunpack.c.h.b16 %v147
    %v318 = vunpack.c.l.b16 %v148
    %v319 = vunpack.c.h.b16 %v148
    %v320 = vunpack.c.l.b16 %v149
    %v321 = vunpack.c.h.b16 %v149
    %v322 = vunpack.c.l.b16 %v150
    %v323 = vunpack.c.h.b16 %v150
    %v324 = vunpack.c.l.b16 %v151
    %v325 = vunpack.c.h.b16 %v151
    %v326 = vpack.c.b16 %v220, %v218
    %v327 = vpack.c.b16 %v221, %v219
    %v328 = vpack.c.b16 %v224, %v222
    %v329 = vpack.c.b16 %v225, %v223
    %v330 = vpack.c.b16 %v228, %v226
    %v331 = vpack.c.b16 %v229, %v227
    %v332 = vpack.c.b16 %v232, %v230
    %v333 = vpack.c.b16 %v233, %v231
    %v334 = vpack.c.b16 %v236, %v234
    %v335 = vpack.c.b16 %v237, %v235
    %v336 = vpack.c.b16 %v240, %v238
    %v337 = vpack.c.b16 %v241, %v239
    %v338 = vpack.c.b16 %v244, %v242
    %v339 = vpack.c.b16 %v245, %v243
    %v340 = vpack.c.b16 %v248, %v246
    %v341 = vpack.c.b16 %v249, %v247
    %v342 = vpack.c.b16 %v252, %v250
    %v343 = vpack.c.b16 %v253, %v251
    %v344 = vpack.c.b16 %v256, %v254
    %v345 = vpack.c.b16 %v257, %v255
    %v346 = vpack.c.b16 %v260, %v258
    %v347 = vpack.c.b16 %v261, %v259
    %v348 = vpack.c.b16 %v264, %v262
    %v349 = vpack.c.b16 %v265, %v263
    %v350 = vpack.c.b16 %v268, %v266
    %v351 = vpack.c.b16 %v269, %v267
    %v352 = vpack.c.b16 %v272, %v270
    %v353 = vpack.c.b16 %v273, %v271
    %v354 = vpack.c.b16 %v276, %v274
    %v355 = vpack.c.b16 %v277, %v275
    %v356 = vpack.c.b16 %v280, %v278
    %v357 = vpack.c.b16 %v281, %v279
    %v358 = vpack.c.b16 %v284, %v282
    %v359 = vpack.c.b16 %v285, %v283
    %v360 = vpack.c.b16 %v288, %v286
    %v361 = vpack.c.b16 %v289, %v287
    %v362 = vpack.c.b16 %v292, %v290
    %v363 = vpack.c.b16 %v293, %v291
    %v364 = vpack.c.b16 %v296, %v294
    %v365 = vpack.c.b16 %v297, %v295
    %v366 = vpack.c.b16 %v300, %v298
    %v367 = vpack.c.b16 %v301, %v299
    %v368 = vpack.c.b16 %v304, %v302
    %v369 = vpack.c.b16 %v305, %v303
    %v370 = vpack.c.b16 %v308, %v306
    %v371 = vpack.c.b16 %v309, %v307
    %v372 = vpack.c.b16 %v312, %v310
    %v373 = vpack.c.b16 %v313, %v311
    %v374 = vpack.c.b16 %v316, %v314
    %v375 = vpack.c.b16 %v317, %v315
    %v376 = vpack.c.b16 %v320, %v318
    %v377 = vpack.c.b16 %v321, %v319
    %v378 = vpack.c.b16 %v324, %v322
    %v379 = vpack.c.b16 %v325, %v323
    %vm432 = vcmask 359424
    %v434 = vsel %vm432, %v95, 0
    %vm436 = vcmask 1045504
    %v438 = vsel %vm436, %v378, 0
    %v441 = vsel %vm436, %v379, 0
    %443 = vmatprep.subr.bf16.mxu0 %v327
    %444 = vmatpush1.bf16.msra.mxu0 %v326
    %445 = vmatprep.subr.bf16.mxu0 %v329
    %446 = vmatpush1.bf16.msra.mxu0 %v328
    %447 = vmatprep.subr.bf16.mxu0 %v331
    %448 = vmatpush1.bf16.msra.mxu0 %v330
    %449 = vmatprep.subr.bf16.mxu0 %v333
    %450 = vmatpush1.bf16.msra.mxu0 %v332
    %451 = vmatprep.subr.bf16.mxu0 %v335
    %452 = vmatpush1.bf16.msra.mxu0 %v334
    %453 = vmatprep.subr.bf16.mxu0 %v337
    %454 = vmatpush1.bf16.msra.mxu0 %v336
    %455 = vmatprep.subr.bf16.mxu0 %v339
    %456 = vmatpush1.bf16.msra.mxu0 %v338
    %457 = vmatprep.subr.bf16.mxu0 %v341
    %458 = vmatpush1.bf16.msra.mxu0 %v340
    %459 = vmatprep.subr.bf16.mxu0 %v343
    %460 = vmatpush1.bf16.msra.mxu0 %v342
    %461 = vmatprep.subr.bf16.mxu0 %v345
    %462 = vmatpush1.bf16.msra.mxu0 %v344
    %463 = vmatprep.subr.bf16.mxu0 %v347
    %464 = vmatpush1.bf16.msra.mxu0 %v346
    %465 = vmatprep.subr.bf16.mxu0 %v349
    %466 = vmatpush1.bf16.msra.mxu0 %v348
    %467 = vmatprep.subr.bf16.mxu0 %v351
    %468 = vmatpush1.bf16.msra.mxu0 %v350
    %469 = vmatprep.subr.bf16.mxu0 %v353
    %470 = vmatpush1.bf16.msra.mxu0 %v352
    %471 = vmatprep.subr.bf16.mxu0 %v355
    %472 = vmatpush1.bf16.msra.mxu0 %v354
    %473 = vmatprep.subr.bf16.mxu0 %v357
    %474 = vmatpush1.bf16.msra.mxu0 %v356
    %475 = vmatprep.mubr.bf16.mxu0 %v93
    %476 = vmatmul.mubr.bf16.gmra.mrb[0].mxu0 %v92
    %v477 = vpop.f32.mrb[0].mxu0
    %v478 = vadd.f32 %v157, %v477
    %v479 = vpop.f32.mrb[0].mxu0
    %v480 = vadd.f32 %v161, %v479
    %v481 = vpop.f32.mrb[0].mxu0
    %v482 = vpop.f32.mrb[0].mxu0
    %483 = vdwg.mxu0
    %484 = vmatprep.subr.bf16.mxu0 %v359
    %485 = vmatpush1.bf16.msra.mxu0 %v358
    %486 = vmatprep.subr.bf16.mxu0 %v361
    %487 = vmatpush1.bf16.msra.mxu0 %v360
    %488 = vmatprep.subr.bf16.mxu0 %v363
    %489 = vmatpush1.bf16.msra.mxu0 %v362
    %490 = vmatprep.subr.bf16.mxu0 %v365
    %491 = vmatpush1.bf16.msra.mxu0 %v364
    %492 = vmatprep.subr.bf16.mxu0 %v367
    %493 = vmatpush1.bf16.msra.mxu0 %v366
    %494 = vmatprep.subr.bf16.mxu0 %v369
    %495 = vmatpush1.bf16.msra.mxu0 %v368
    %496 = vmatprep.subr.bf16.mxu0 %v371
    %497 = vmatpush1.bf16.msra.mxu0 %v370
    %498 = vmatprep.subr.bf16.mxu0 %v373
    %499 = vmatpush1.bf16.msra.mxu0 %v372
    %500 = vmatprep.subr.bf16.mxu0 %v375
    %501 = vmatpush1.bf16.msra.mxu0 %v374
    %502 = vmatprep.subr.bf16.mxu0 %v377
    %503 = vmatpush1.bf16.msra.mxu0 %v376
    %504 = vmatprep.subr.bf16.mxu0 %v441
    %505 = vmatpush1.bf16.msra.mxu0 %v438
    %506 = vmatprep.subr.bf16.mxu0 0
    %507 = vmatpush1.bf16.msra.mxu0 0
    %508 = vmatprep.subr.bf16.mxu0 0
    %509 = vmatpush1.bf16.msra.mxu0 0
    %510 = vmatprep.subr.bf16.mxu0 0
    %511 = vmatpush1.bf16.msra.mxu0 0
    %512 = vmatprep.subr.bf16.mxu0 0
    %513 = vmatpush1.bf16.msra.mxu0 0
    %514 = vmatprep.subr.bf16.mxu0 0
    %515 = vmatpush1.bf16.msra.mxu0 0
    %516 = vmatprep.mubr.bf16.mxu0 %v434
    %517 = vmatmul.mubr.bf16.gmra.mrb[0].mxu0 %v94
    %v518 = vpop.f32.mrb[0].mxu0
    %v519 = vadd.f32 %v478, %v518
    %v520 = vpop.f32.mrb[0].mxu0
    %v521 = vadd.f32 %v480, %v520
    %v522 = vpop.f32.mrb[0].mxu0
    %v523 = vpop.f32.mrb[0].mxu0
    %524 = vdwg.mxu0
    %v525 = vtanh.pop %v519
    %v526 = vtanh.pop %v521
    %v527 = vpack.c.bf16 %v525, %v525
    %v528 = vpack.c.bf16 %v526, %v526
    %v529 = vld [vmem:[#allocation5] sm:$0xf]
    %v530 = vld [vmem:[#allocation5 + $0x4] sm:$0xf]
    %v531 = vld [vmem:[#allocation5 + $0x8] sm:$0xf]
    %v532 = vld [vmem:[#allocation5 + $0xc] sm:$0xf]
    %v533 = vld [vmem:[#allocation5 + $0x10] sm:$0xf]
    %v534 = vld [vmem:[#allocation5 + $0x14] sm:$0xf]
    %v535 = vld [vmem:[#allocation5 + $0x18] sm:$0xf]
    %v536 = vld [vmem:[#allocation5 + $0x1c] sm:$0xf]
    %v537 = vld [vmem:[#allocation5 + $0x20] sm:$0xf]
    %v538 = vld [vmem:[#allocation5 + $0x24] sm:$0xf]
    %v539 = vld [vmem:[#allocation5 + $0x28] sm:$0xf]
    %v540 = vld [vmem:[#allocation5 + $0x2c] sm:$0xf]
    %v541 = vld [vmem:[#allocation5 + $0x30] sm:$0xf]
    %v542 = vld [vmem:[#allocation5 + $0x34] sm:$0xf]
    %v543 = vld [vmem:[#allocation5 + $0x38] sm:$0xf]
    %v544 = vld [vmem:[#allocation5 + $0x3c] sm:$0xf]
    %v545 = vld [vmem:[#allocation5 + $0x40] sm:$0xf]
    %v546 = vld [vmem:[#allocation5 + $0x44] sm:$0xf]
    %v547 = vld [vmem:[#allocation5 + $0x48] sm:$0xf]
    %v548 = vld [vmem:[#allocation5 + $0x4c] sm:$0xf]
    %v549 = vld [vmem:[#allocation5 + $0x50] sm:$0xf]
    %v550 = vld [vmem:[#allocation5 + $0x54] sm:$0xf]
    %v551 = vld [vmem:[#allocation5 + $0x58] sm:$0xf]
    %v552 = vld [vmem:[#allocation5 + $0x5c] sm:$0xf]
    %v553 = vld [vmem:[#allocation5 + $0x60] sm:$0xf]
    %v554 = vld [vmem:[#allocation5 + $0x64] sm:$0xf]
    %v555 = vld [vmem:[#allocation5 + $0x68] sm:$0xf]
    %v556 = vld [vmem:[#allocation5 + $0x6c] sm:$0xf]
    %v557 = vld [vmem:[#allocation5 + $0x70] sm:$0xf]
    %v558 = vld [vmem:[#allocation5 + $0x74] sm:$0xf]
    %v559 = vld [vmem:[#allocation5 + $0x78] sm:$0xf]
    %v560 = vld [vmem:[#allocation5 + $0x7c] sm:$0xf]
    %v561 = vld [vmem:[%s5] sm:$0x7]
    %vm562 = vcmask 48128
    %v564 = vsel %vm562, %v97, 0
    %vm566 = vcmask 1042432
    %v568 = vsel %vm566, %v561, 0
    %570 = vmatprep.subr.bf16.mxu0 0
    %571 = vmatpush1.bf16.msra.mxu0 %v568
    %572 = vmatprep.subr.bf16.mxu0 0
    %573 = vmatpush1.bf16.msra.mxu0 0
    %574 = vmatprep.subr.bf16.mxu0 0
    %575 = vmatpush1.bf16.msra.mxu0 0
    %576 = vmatprep.subr.bf16.mxu0 0
    %577 = vmatpush1.bf16.msra.mxu0 0
    %578 = vmatprep.subr.bf16.mxu0 0
    %579 = vmatpush1.bf16.msra.mxu0 0
    %580 = vmatprep.subr.bf16.mxu0 0
    %581 = vmatpush1.bf16.msra.mxu0 0
    %582 = vmatprep.subr.bf16.mxu0 0
    %583 = vmatpush1.bf16.msra.mxu0 0
    %584 = vmatprep.subr.bf16.mxu0 0
    %585 = vmatpush1.bf16.msra.mxu0 0
    %586 = vmatprep.subr.bf16.mxu0 0
    %587 = vmatpush1.bf16.msra.mxu0 0
    %588 = vmatprep.subr.bf16.mxu0 0
    %589 = vmatpush1.bf16.msra.mxu0 0
    %590 = vmatprep.subr.bf16.mxu0 0
    %591 = vmatpush1.bf16.msra.mxu0 0
    %592 = vmatprep.subr.bf16.mxu0 0
    %593 = vmatpush1.bf16.msra.mxu0 0
    %594 = vmatprep.subr.bf16.mxu0 0
    %595 = vmatpush1.bf16.msra.mxu0 0
    %596 = vmatprep.subr.bf16.mxu0 0
    %597 = vmatpush1.bf16.msra.mxu0 0
    %598 = vmatprep.subr.bf16.mxu0 0
    %599 = vmatpush1.bf16.msra.mxu0 0
    %600 = vmatprep.subr.bf16.mxu0 0
    %601 = vmatpush1.bf16.msra.mxu0 0
    %602 = vmatprep.mubr.bf16.mxu0 0
    %603 = vmatmul.mubr.bf16.gmra.mrb[0].mxu0 %v564
    %v604 = vpop.f32.mrb[0].mxu0
    %v605 = vadd.f32 0.0, %v604
    %v606 = vpop.f32.mrb[0].mxu0
    %v607 = vpop.f32.mrb[0].mxu0
    %v608 = vpop.f32.mrb[0].mxu0
    %609 = vdwg.mxu0
    %v642 = vunpack.c.l.b16 %v529
    %v643 = vunpack.c.l.b16 %v530
    %v644 = vunpack.c.l.b16 %v531
    %v645 = vunpack.c.l.b16 %v532
    %v646 = vunpack.c.l.b16 %v533
    %v647 = vunpack.c.l.b16 %v534
    %v648 = vunpack.c.l.b16 %v535
    %v649 = vunpack.c.l.b16 %v536
    %v650 = vunpack.c.l.b16 %v537
    %v651 = vunpack.c.l.b16 %v538
    %v652 = vunpack.c.l.b16 %v539
    %v653 = vunpack.c.l.b16 %v540
    %v654 = vunpack.c.l.b16 %v541
    %v655 = vunpack.c.l.b16 %v542
    %v656 = vunpack.c.l.b16 %v543
    %v657 = vunpack.c.l.b16 %v544
    %v658 = vunpack.c.l.b16 %v545
    %v659 = vunpack.c.l.b16 %v546
    %v660 = vunpack.c.l.b16 %v547
    %v661 = vunpack.c.l.b16 %v548
    %v662 = vunpack.c.l.b16 %v549
    %v663 = vunpack.c.l.b16 %v550
    %v664 = vunpack.c.l.b16 %v551
    %v665 = vunpack.c.l.b16 %v552
    %v666 = vunpack.c.l.b16 %v553
    %v667 = vunpack.c.l.b16 %v554
    %v668 = vunpack.c.l.b16 %v555
    %v669 = vunpack.c.l.b16 %v556
    %v670 = vunpack.c.l.b16 %v557
    %v671 = vunpack.c.l.b16 %v558
    %v672 = vunpack.c.l.b16 %v559
    %v673 = vunpack.c.l.b16 %v560
    %v674 = vpack.c.b16 %v643, %v642
    %v675 = vpack.c.b16 %v645, %v644
    %v676 = vpack.c.b16 %v647, %v646
    %v677 = vpack.c.b16 %v649, %v648
    %v678 = vpack.c.b16 %v651, %v650
    %v679 = vpack.c.b16 %v653, %v652
    %v680 = vpack.c.b16 %v655, %v654
    %v681 = vpack.c.b16 %v657, %v656
    %v682 = vpack.c.b16 %v659, %v658
    %v683 = vpack.c.b16 %v661, %v660
    %v684 = vpack.c.b16 %v663, %v662
    %v685 = vpack.c.b16 %v665, %v664
    %v686 = vpack.c.b16 %v667, %v666
    %v687 = vpack.c.b16 %v669, %v668
    %v688 = vpack.c.b16 %v671, %v670
    %v689 = vpack.c.b16 %v673, %v672
    %706 = vmatprep.subr.bf16.mxu0 0
    %707 = vmatpush1.bf16.msra.mxu0 %v674
    %708 = vmatprep.subr.bf16.mxu0 0
    %709 = vmatpush1.bf16.msra.mxu0 %v675
    %710 = vmatprep.subr.bf16.mxu0 0
    %711 = vmatpush1.bf16.msra.mxu0 %v676
    %712 = vmatprep.subr.bf16.mxu0 0
    %713 = vmatpush1.bf16.msra.mxu0 %v677
    %714 = vmatprep.subr.bf16.mxu0 0
    %715 = vmatpush1.bf16.msra.mxu0 %v678
    %716 = vmatprep.subr.bf16.mxu0 0
    %717 = vmatpush1.bf16.msra.mxu0 %v679
    %718 = vmatprep.subr.bf16.mxu0 0
    %719 = vmatpush1.bf16.msra.mxu0 %v680
    %720 = vmatprep.subr.bf16.mxu0 0
    %721 = vmatpush1.bf16.msra.mxu0 %v681
    %722 = vmatprep.subr.bf16.mxu0 0
    %723 = vmatpush1.bf16.msra.mxu0 %v682
    %724 = vmatprep.subr.bf16.mxu0 0
    %725 = vmatpush1.bf16.msra.mxu0 %v683
    %726 = vmatprep.subr.bf16.mxu0 0
    %727 = vmatpush1.bf16.msra.mxu0 %v684
    %728 = vmatprep.subr.bf16.mxu0 0
    %729 = vmatpush1.bf16.msra.mxu0 %v685
    %730 = vmatprep.subr.bf16.mxu0 0
    %731 = vmatpush1.bf16.msra.mxu0 %v686
    %732 = vmatprep.subr.bf16.mxu0 0
    %733 = vmatpush1.bf16.msra.mxu0 %v687
    %734 = vmatprep.subr.bf16.mxu0 0
    %735 = vmatpush1.bf16.msra.mxu0 %v688
    %736 = vmatprep.subr.bf16.mxu0 0
    %737 = vmatpush1.bf16.msra.mxu0 %v689
    %738 = vmatprep.mubr.bf16.mxu0 %v528
    %739 = vmatmul.mubr.bf16.gmra.mrb[0].mxu0 %v527
    %v740 = vpop.f32.mrb[0].mxu0
    %v741 = vadd.f32 %v605, %v740
    %v742 = vpop.f32.mrb[0].mxu0
    %v743 = vpop.f32.mrb[0].mxu0
    %v744 = vpop.f32.mrb[0].mxu0
    %745 = vdwg.mxu0
    %v746 = vld [vmem:[%s6] sm:$0x1]
    %v748 = vlaneseq
    %v749 = vshrl.u32 %v748, 7
    %v750 = vsub.s32 0, %v749
    %v751 = vrot.slane %v746, %v750
    %v753 = vadd.f32 %v741, %v751
    %v754 = vtanh.pop %v753
    %v755 = vpack.c.bf16 %v754, %v754
    %v756 = vld [vmem:[%s7] sm:$0xf]
    %v757 = vld [vmem:[%s7 + $0x4] sm:$0xf]
    %v758 = vld [vmem:[%s7 + $0x8] sm:$0xf]
    %v759 = vld [vmem:[%s7 + $0xc] sm:$0xf]
    %v760 = vld [vmem:[%s7 + $0x10] sm:$0xf]
    %v761 = vld [vmem:[%s7 + $0x14] sm:$0xf]
    %v762 = vld [vmem:[%s7 + $0x18] sm:$0xf]
    %v763 = vld [vmem:[%s7 + $0x1c] sm:$0xf]
    %v764 = vld [vmem:[%s7 + $0x20] sm:$0xf]
    %v765 = vld [vmem:[%s7 + $0x24] sm:$0xf]
    %v766 = vld [vmem:[%s7 + $0x28] sm:$0xf]
    %v767 = vld [vmem:[%s7 + $0x2c] sm:$0xf]
    %v768 = vld [vmem:[%s7 + $0x30] sm:$0xf]
    %v769 = vld [vmem:[%s7 + $0x34] sm:$0xf]
    %v770 = vld [vmem:[%s7 + $0x38] sm:$0xf]
    %v771 = vld [vmem:[%s7 + $0x3c] sm:$0xf]
    %v772 = vld [vmem:[%s8] sm:$0x1]
    %v774 = vlaneseq
    %v775 = vshrl.u32 %v774, 7
    %v776 = vsub.s32 0, %v775
    %v777 = vrot.slane %v772, %v776
    %v795 = vunpack.c.l.b16 %v756
    %v796 = vunpack.c.l.b16 %v757
    %v797 = vunpack.c.l.b16 %v758
    %v798 = vunpack.c.l.b16 %v759
    %v799 = vunpack.c.l.b16 %v760
    %v800 = vunpack.c.l.b16 %v761
    %v801 = vunpack.c.l.b16 %v762
    %v802 = vunpack.c.l.b16 %v763
    %v803 = vunpack.c.l.b16 %v764
    %v804 = vunpack.c.l.b16 %v765
    %v805 = vunpack.c.l.b16 %v766
    %v806 = vunpack.c.l.b16 %v767
    %v807 = vunpack.c.l.b16 %v768
    %v808 = vunpack.c.l.b16 %v769
    %v809 = vunpack.c.l.b16 %v770
    %v810 = vunpack.c.l.b16 %v771
    %v811 = vpack.c.b16 %v796, %v795
    %v812 = vpack.c.b16 %v798, %v797
    %v813 = vpack.c.b16 %v800, %v799
    %v814 = vpack.c.b16 %v802, %v801
    %v815 = vpack.c.b16 %v804, %v803
    %v816 = vpack.c.b16 %v806, %v805
    %v817 = vpack.c.b16 %v808, %v807
    %v818 = vpack.c.b16 %v810, %v809
    %827 = vmatprep.subr.bf16.mxu0 0
    %828 = vmatpush1.bf16.msra.mxu0 %v811
    %829 = vmatprep.subr.bf16.mxu0 0
    %830 = vmatpush1.bf16.msra.mxu0 %v812
    %831 = vmatprep.subr.bf16.mxu0 0
    %832 = vmatpush1.bf16.msra.mxu0 %v813
    %833 = vmatprep.subr.bf16.mxu0 0
    %834 = vmatpush1.bf16.msra.mxu0 %v814
    %835 = vmatprep.subr.bf16.mxu0 0
    %836 = vmatpush1.bf16.msra.mxu0 %v815
    %837 = vmatprep.subr.bf16.mxu0 0
    %838 = vmatpush1.bf16.msra.mxu0 %v816
    %839 = vmatprep.subr.bf16.mxu0 0
    %840 = vmatpush1.bf16.msra.mxu0 %v817
    %841 = vmatprep.subr.bf16.mxu0 0
    %842 = vmatpush1.bf16.msra.mxu0 %v818
    %843 = vmatprep.subr.bf16.mxu0 0
    %844 = vmatpush1.bf16.msra.mxu0 0
    %845 = vmatprep.subr.bf16.mxu0 0
    %846 = vmatpush1.bf16.msra.mxu0 0
    %847 = vmatprep.subr.bf16.mxu0 0
    %848 = vmatpush1.bf16.msra.mxu0 0
    %849 = vmatprep.subr.bf16.mxu0 0
    %850 = vmatpush1.bf16.msra.mxu0 0
    %851 = vmatprep.subr.bf16.mxu0 0
    %852 = vmatpush1.bf16.msra.mxu0 0
    %853 = vmatprep.subr.bf16.mxu0 0
    %854 = vmatpush1.bf16.msra.mxu0 0
    %855 = vmatprep.subr.bf16.mxu0 0
    %856 = vmatpush1.bf16.msra.mxu0 0
    %857 = vmatprep.subr.bf16.mxu0 0
    %858 = vmatpush1.bf16.msra.mxu0 0
    %859 = vmatprep.mubr.bf16.mxu0 0
    %860 = vmatmul.mubr.bf16.gmra.mrb[0].mxu0 %v755
    %v861 = vpop.f32.mrb[0].mxu0
    %v862 = vadd.f32 %v777, %v861
    %v863 = vpop.f32.mrb[0].mxu0
    %v864 = vpop.f32.mrb[0].mxu0
    %v865 = vpop.f32.mrb[0].mxu0
    %866 = vdwg.mxu0
    %v867 = vtanh.pop %v862
    %v868 = vld [vmem:[%s9] sm:$0x1]
    %v870 = vlaneseq
    %v871 = vshrl.u32 %v870, 7
    %v872 = vsub.s32 0, %v871
    %v873 = vrot.slane %v868, %v872
    %v875 = vmul.f32 %v867, %v873
    %vm876 = vcmask 517120
    %v877 = vsel %vm876, %v875, 0.0
    %878 = vadd.xlane.f32.xlu0 %v877
    %v879 = vpop.xlane.xlu0 %878
    %v880 = vld [vmem:[#allocation2] sm:$0x1]
    %v882 = vlaneseq
    %v883 = vshrl.u32 %v882, 7
    %v884 = vsub.s32 0, %v883
    %v885 = vrot.slane %v880, %v884
    %v887 = vadd.f32 %v879, %v885
    %v888 = vtanh.pop %v887
    %vm889 = vcmask 1024
    %890 = vst.msk [vmem:[%s11] sm:$0x3] %vm889, %v888
    // Predicated region
    $region54: #{tpu_custom_call.1} parent=1 // pred_check
      _
    $region55: #{tpu_custom_call.1} parent=1 // pred_check_branch
      %892 = sbr.rel (0) target = $region57
    $region56: #{tpu_custom_call.1} parent=1 // pred_region
      _
    $region57: #{tpu_custom_call.1} parent=1 // pred_fallthru
      _
    // Predicated region
    $region58: #{tpu_custom_call.1} parent=1 // pred_check
      _
    $region59: #{tpu_custom_call.1} parent=1 // pred_check_branch
      %894 = sbr.rel (0) target = $region61
    $region60: #{tpu_custom_call.1} parent=1 // pred_region
      _
    $region61: #{tpu_custom_call.1} parent=1 // pred_fallthru
      _
    %895 = vsyncpa [#allocation4], 1
    %896 = vsyncpa [#allocation6], 1

</llo_original>
